<compile_context>
chip_gen: v5e
topology: v5e:2x2
jax: 0.10.0
libtpu: 0.0.40
codegen_flags: <defaults>
</compile_context>

<pallas_src>
import jax
import jax.numpy as jnp
from jax.experimental import pallas as pl
from jax.experimental.pallas import tpu as pltpu


def wavenet_forward(u, T, lat, ps, lat_ind, params, tvars, *, batch_tile=2048):
    B, nlev = u.shape
    n_out, d0, d1 = params['W1'].shape
    d2 = params['W2'].shape[2]

    li = lat_ind[:, 0].astype(jnp.int32)

    # ---- lat_ind gathers + standardization (wrapper-side, fused by XLA) ----
    def per_row(tab):                       # (1, C, nlat, 1) -> (B, C)
        return tab[0, :, :, 0].T[li]

    def scale(x, m, s):                     # identical to the PyTorch scaler
        return jnp.nan_to_num((x - m) / s, nan=0.0)

    u_s = scale(u, per_row(tvars['u_mean']), per_row(tvars['u_sd']))
    T_s = scale(T, per_row(tvars['T_mean']), per_row(tvars['T_sd']))
    ps_s = scale(ps,
                 tvars['ps_mean'][0, 0, :, 0][li][:, None],
                 tvars['ps_sd'][0, 0, :, 0][li][:, None])
    g_mean = per_row(tvars['gwfu_mean'])                            # (B, n_out)
    g_sd = per_row(tvars['gwfu_sd'])                                # (B, n_out)

    # Single packed row slab: [g_mean | g_sd | u_s | T_s | lat | ps_s].
    slab = jnp.concatenate([g_mean, g_sd, u_s, T_s, lat, ps_s],
                           axis=1).astype(jnp.float32)              # (B, c_in)
    c_in = slab.shape[1]                    # 2*n_out + 2*nlev + 2

    # ---- weights: fused first layer + lane-dense / block-diag branches ----
    Ws = jnp.concatenate([params['Wu'], params['Wt'],
                          params['Wl'], params['Wp']], axis=0)      # (n_in, d0)
    W0 = jnp.concatenate([jnp.zeros((2 * n_out, d0), jnp.float32), Ws],
                         axis=0).astype(jnp.bfloat16)               # (c_in, d0)
    bs = params['bs'].reshape(1, d0).astype(jnp.float32)

    eye = jnp.eye(n_out, dtype=jnp.float32)
    W1f = jnp.transpose(params['W1'], (1, 0, 2)).reshape(
        d0, n_out * d1).astype(jnp.bfloat16)                        # (d0, n_out*d1)
    b1f = params['b1'].reshape(1, n_out * d1).astype(jnp.float32)
    W2bd = jnp.einsum('jde,jk->jdke', params['W2'], eye).reshape(
        n_out * d1, n_out * d2).astype(jnp.bfloat16)                # block-diag
    b2f = params['b2'].reshape(1, n_out * d2).astype(jnp.float32)
    W3bd = jnp.einsum('je,jk->jek', params['W3'], eye).reshape(
        n_out * d2, n_out).astype(jnp.bfloat16)                     # block-diag
    b3f = params['b3'].reshape(1, n_out).astype(jnp.float32)

    tb = B if B <= batch_tile else batch_tile
    grid = (pl.cdiv(B, tb),)

    def kernel(x_ref, w0_ref, bs_ref, w1_ref, b1_ref, w2_ref, b2_ref,
               w3_ref, b3_ref, out_ref):
        x = x_ref[...]                                              # (tb, c_in) f32
        # Fused shared layer: g_mean/g_sd rows of W0 are zero, so the whole
        # slab is the LHS of a single MXU matmul. bf16 operands, f32 accum.
        z = jnp.maximum(
            jnp.dot(x.astype(jnp.bfloat16), w0_ref[...],
                    preferred_element_type=jnp.float32) + bs_ref[...], 0.0)
        h1 = jnp.maximum(
            jnp.dot(z.astype(jnp.bfloat16), w1_ref[...],
                    preferred_element_type=jnp.float32) + b1_ref[...], 0.0)
        h2 = jnp.maximum(
            jnp.dot(h1.astype(jnp.bfloat16), w2_ref[...],
                    preferred_element_type=jnp.float32) + b2_ref[...], 0.0)
        gu = (jnp.dot(h2.astype(jnp.bfloat16), w3_ref[...],
                      preferred_element_type=jnp.float32) + b3_ref[...])
        # inverse standard scaler (g_mean / g_sd read back from the f32 slab).
        out_ref[...] = gu * x[:, n_out:2 * n_out] + x[:, 0:n_out]

    row_spec = pl.BlockSpec((tb, c_in), lambda i: (i, 0))

    def const_spec(a):
        return pl.BlockSpec(a.shape, lambda i: (0, 0))

    wgt_args = (W0, bs, W1f, b1f, W2bd, b2f, W3bd, b3f)

    out = pl.pallas_call(
        kernel,
        out_shape=jax.ShapeDtypeStruct((B, n_out), jnp.float32),
        grid=grid,
        in_specs=[row_spec] + [const_spec(a) for a in wgt_args],
        out_specs=pl.BlockSpec((tb, n_out), lambda i: (i, 0)),
        compiler_params=pltpu.CompilerParams(
            # "parallel" lets the megacore shard the batch grid; on v7x one may
            # additionally verify both TensorCores are used (CORE_PARALLEL).
            dimension_semantics=("parallel",),
            vmem_limit_bytes=32 * 1024 * 1024),
    )(slab, *wgt_args)
    return out                                                      # (B, n_out)


def reference_forward(u, T, lat, ps, lat_ind, params, tvars):
    """Pure-JAX f32 replica of the PyTorch forward (for verification)."""
    li = lat_ind[:, 0].astype(jnp.int32)

    def per_row(tab):
        return tab[0, :, :, 0].T[li]

    u_mean, u_sd = per_row(tvars['u_mean']), per_row(tvars['u_sd'])
    T_mean, T_sd = per_row(tvars['T_mean']), per_row(tvars['T_sd'])
    ps_mean = tvars['ps_mean'][0, 0, :, 0][li][:, None]
    ps_sd = tvars['ps_sd'][0, 0, :, 0][li][:, None]
    g_mean, g_sd = per_row(tvars['gwfu_mean']), per_row(tvars['gwfu_sd'])

    def scale(x, m, s):
        return jnp.nan_to_num((x - m) / s, nan=0.0)

    x = jnp.concatenate([scale(u, u_mean, u_sd), scale(T, T_mean, T_sd),
                         lat, scale(ps, ps_mean, ps_sd)], axis=1)
    Ws = jnp.concatenate([params['Wu'], params['Wt'], params['Wl'],
                          params['Wp']], axis=0)
    z = jax.nn.relu(x @ Ws + params['bs'])
    cols = []
    for j in range(params['W1'].shape[0]):
        h1 = jax.nn.relu(z @ params['W1'][j] + params['b1'][j])
        h2 = jax.nn.relu(h1 @ params['W2'][j] + params['b2'][j])
        cols.append(h2 @ params['W3'][j] + params['b3'][j, 0])
    gu = jnp.stack(cols, axis=1)                                    # (B, n_out)
    return gu * g_sd + g_mean


def _xavier(key, fan_in, fan_out):
    lim = float((6.0 / (fan_in + fan_out)) ** 0.5)
    return jax.random.uniform(key, (fan_in, fan_out), jnp.float32, -lim, lim)


if __name__ == "__main__":
    B, nlev, nlat = 64, 8, 16
    n_d = [32, 16, 8, 1]
    n_out = 8                                # -> n_out*d1 = 128 (one lane width)
    n_in = 2 * nlev + 2                      # u levels + T levels + lat + ps

    key = jax.random.PRNGKey(0)
    ks = jax.random.split(key, 24)

    # ---- deterministic parameters (synthetic; no checkpoint load) ----
    Ws = _xavier(ks[0], n_in, n_d[0])
    params = {
        'Wu': Ws[:nlev],
        'Wt': Ws[nlev:2 * nlev],
        'Wl': Ws[2 * nlev:2 * nlev + 1],
        'Wp': Ws[2 * nlev + 1:],
        'bs': 0.01 * jax.random.normal(ks[1], (1, n_d[0]), jnp.float32),
        'W1': jnp.stack([_xavier(k, n_d[0], n_d[1])
                         for k in jax.random.split(ks[2], n_out)]),
        'b1': 0.01 * jax.random.normal(ks[3], (n_out, n_d[1]), jnp.float32),
        'W2': jnp.stack([_xavier(k, n_d[1], n_d[2])
                         for k in jax.random.split(ks[4], n_out)]),
        'b2': 0.01 * jax.random.normal(ks[5], (n_out, n_d[2]), jnp.float32),
        'W3': jnp.stack([_xavier(k, n_d[2], n_d[3])[:, 0]
                         for k in jax.random.split(ks[6], n_out)]),
        'b3': 0.01 * jax.random.normal(ks[7], (n_out, 1), jnp.float32),
    }

    # ---- deterministic transform_vars ----
    tvars = {
        'u_mean': jax.random.normal(ks[8], (1, nlev, nlat, 1), jnp.float32),
        'u_sd': jnp.abs(jax.random.normal(ks[9], (1, nlev, nlat, 1), jnp.float32)) + 0.5,
        'T_mean': jax.random.normal(ks[10], (1, nlev, nlat, 1), jnp.float32),
        'T_sd': jnp.abs(jax.random.normal(ks[11], (1, nlev, nlat, 1), jnp.float32)) + 0.5,
        'ps_mean': jax.random.normal(ks[12], (1, 1, nlat, 1), jnp.float32),
        'ps_sd': jnp.abs(jax.random.normal(ks[13], (1, 1, nlat, 1), jnp.float32)) + 0.5,
        'gwfu_mean': jax.random.normal(ks[14], (1, n_out, nlat, 1), jnp.float32),
        'gwfu_sd': jnp.abs(jax.random.normal(ks[15], (1, n_out, nlat, 1), jnp.float32)) + 0.5,
    }

    # ---- deterministic example inputs ----
    u = jax.random.normal(ks[16], (B, nlev), jnp.float32)
    T = jax.random.normal(ks[17], (B, nlev), jnp.float32)
    lat = jax.random.uniform(ks[18], (B, 1), jnp.float32, -1.0, 1.0)
    ps = jax.random.normal(ks[19], (B, 1), jnp.float32)
    lat_ind = jax.random.randint(ks[20], (B, 1), 0, nlat, jnp.int32)

    ref = reference_forward(u, T, lat, ps, lat_ind, params, tvars)

    # single-tile path
    out = jax.block_until_ready(
        wavenet_forward(u, T, lat, ps, lat_ind, params, tvars))
    # multi-step grid path (exercises batch tiling + constant weight blocks)
    out_tiled = jax.block_until_ready(
        wavenet_forward(u, T, lat, ps, lat_ind, params, tvars, batch_tile=16))

    assert out.shape == (B, n_out), out.shape
    # bf16 MXU operands with f32 accumulation -> relaxed tolerance vs f32 ref.
    assert jnp.allclose(out, ref, rtol=5e-2, atol=5e-2), \
        float(jnp.max(jnp.abs(out - ref)))
    assert jnp.allclose(out_tiled, ref, rtol=5e-2, atol=5e-2), \
        float(jnp.max(jnp.abs(out_tiled - ref)))

    # TODO(synk): nn.Dropout(rate=0.0) is an identity in eval / zero-rate; omitted.
    print("KERNEL_OK")
</pallas_src>

<mosaic_0001>
module attributes {stable_mosaic.version = 11 : i64} {
  func.func @kernel(%arg0: i32, %arg1: memref<64x34xf32, #tpu.memory_space<vmem>>, %arg2: memref<34x32xbf16, #tpu.memory_space<vmem>>, %arg3: memref<1x32xf32, #tpu.memory_space<vmem>>, %arg4: memref<32x128xbf16, #tpu.memory_space<vmem>>, %arg5: memref<1x128xf32, #tpu.memory_space<vmem>>, %arg6: memref<128x64xbf16, #tpu.memory_space<vmem>>, %arg7: memref<1x64xf32, #tpu.memory_space<vmem>>, %arg8: memref<64x8xbf16, #tpu.memory_space<vmem>>, %arg9: memref<1x8xf32, #tpu.memory_space<vmem>>, %arg10: memref<64x8xf32, #tpu.memory_space<vmem>>) attributes {dimension_semantics = [#tpu.dimension_semantics<parallel>], iteration_bounds = array<i64: 1>, scalar_prefetch = 0 : i64, scratch_operands = 0 : i64, tpu.core_type = #tpu.core_type<tc>, window_params = [{transform_indices = @transform_0, window_bounds = array<i64: 64, 34>}, {pipeline_mode = #tpu.pipeline_mode<synchronous>, transform_indices = @transform_1, window_bounds = array<i64: 34, 32>}, {pipeline_mode = #tpu.pipeline_mode<synchronous>, transform_indices = @transform_2, window_bounds = array<i64: 1, 32>}, {pipeline_mode = #tpu.pipeline_mode<synchronous>, transform_indices = @transform_3, window_bounds = array<i64: 32, 128>}, {pipeline_mode = #tpu.pipeline_mode<synchronous>, transform_indices = @transform_4, window_bounds = array<i64: 1, 128>}, {pipeline_mode = #tpu.pipeline_mode<synchronous>, transform_indices = @transform_5, window_bounds = array<i64: 128, 64>}, {pipeline_mode = #tpu.pipeline_mode<synchronous>, transform_indices = @transform_6, window_bounds = array<i64: 1, 64>}, {pipeline_mode = #tpu.pipeline_mode<synchronous>, transform_indices = @transform_7, window_bounds = array<i64: 64, 8>}, {pipeline_mode = #tpu.pipeline_mode<synchronous>, transform_indices = @transform_8, window_bounds = array<i64: 1, 8>}, {transform_indices = @transform_9, window_bounds = array<i64: 64, 8>}]} {
    %c0 = arith.constant 0 : index
    %c0_0 = arith.constant 0 : index
    %0 = vector.load %arg1[%c0, %c0_0] : memref<64x34xf32, #tpu.memory_space<vmem>>, vector<64x34xf32>
    %1 = arith.truncf %0 : vector<64x34xf32> to vector<64x34xbf16>
    %c0_1 = arith.constant 0 : index
    %c0_2 = arith.constant 0 : index
    %2 = vector.load %arg2[%c0_1, %c0_2] : memref<34x32xbf16, #tpu.memory_space<vmem>>, vector<34x32xbf16>
    %cst = arith.constant dense<0.000000e+00> : vector<64x32xf32>
    %3 = tpu.matmul %1, %2, %cst {dimension_numbers = #tpu.dot_dimension_numbers<[1], [0], [0], [1], [0, 0, 1, 1], [], []>} : vector<64x34xbf16>, vector<34x32xbf16>, vector<64x32xf32> -> vector<64x32xf32>
    %c0_3 = arith.constant 0 : index
    %c0_4 = arith.constant 0 : index
    %4 = vector.load %arg3[%c0_3, %c0_4] : memref<1x32xf32, #tpu.memory_space<vmem>>, vector<1x32xf32>
    %5 = vector.broadcast %4 : vector<1x32xf32> to vector<64x32xf32>
    %6 = arith.addf %3, %5 : vector<64x32xf32>
    %cst_5 = arith.constant 0.000000e+00 : f32
    %7 = vector.broadcast %cst_5 : f32 to vector<64x32xf32>
    %8 = arith.maximumf %6, %7 : vector<64x32xf32>
    %9 = arith.truncf %8 : vector<64x32xf32> to vector<64x32xbf16>
    %c0_6 = arith.constant 0 : index
    %c0_7 = arith.constant 0 : index
    %10 = vector.load %arg4[%c0_6, %c0_7] : memref<32x128xbf16, #tpu.memory_space<vmem>>, vector<32x128xbf16>
    %cst_8 = arith.constant dense<0.000000e+00> : vector<64x128xf32>
    %11 = tpu.matmul %9, %10, %cst_8 {dimension_numbers = #tpu.dot_dimension_numbers<[1], [0], [0], [1], [0, 0, 1, 1], [], []>} : vector<64x32xbf16>, vector<32x128xbf16>, vector<64x128xf32> -> vector<64x128xf32>
    %c0_9 = arith.constant 0 : index
    %c0_10 = arith.constant 0 : index
    %12 = vector.load %arg5[%c0_9, %c0_10] : memref<1x128xf32, #tpu.memory_space<vmem>>, vector<1x128xf32>
    %13 = vector.broadcast %12 : vector<1x128xf32> to vector<64x128xf32>
    %14 = arith.addf %11, %13 : vector<64x128xf32>
    %cst_11 = arith.constant 0.000000e+00 : f32
    %15 = vector.broadcast %cst_11 : f32 to vector<64x128xf32>
    %16 = arith.maximumf %14, %15 : vector<64x128xf32>
    %17 = arith.truncf %16 : vector<64x128xf32> to vector<64x128xbf16>
    %c0_12 = arith.constant 0 : index
    %c0_13 = arith.constant 0 : index
    %18 = vector.load %arg6[%c0_12, %c0_13] : memref<128x64xbf16, #tpu.memory_space<vmem>>, vector<128x64xbf16>
    %cst_14 = arith.constant dense<0.000000e+00> : vector<64x64xf32>
    %19 = tpu.matmul %17, %18, %cst_14 {dimension_numbers = #tpu.dot_dimension_numbers<[1], [0], [0], [1], [0, 0, 1, 1], [], []>} : vector<64x128xbf16>, vector<128x64xbf16>, vector<64x64xf32> -> vector<64x64xf32>
    %c0_15 = arith.constant 0 : index
    %c0_16 = arith.constant 0 : index
    %20 = vector.load %arg7[%c0_15, %c0_16] : memref<1x64xf32, #tpu.memory_space<vmem>>, vector<1x64xf32>
    %21 = vector.broadcast %20 : vector<1x64xf32> to vector<64x64xf32>
    %22 = arith.addf %19, %21 : vector<64x64xf32>
    %cst_17 = arith.constant 0.000000e+00 : f32
    %23 = vector.broadcast %cst_17 : f32 to vector<64x64xf32>
    %24 = arith.maximumf %22, %23 : vector<64x64xf32>
    %25 = arith.truncf %24 : vector<64x64xf32> to vector<64x64xbf16>
    %c0_18 = arith.constant 0 : index
    %c0_19 = arith.constant 0 : index
    %26 = vector.load %arg8[%c0_18, %c0_19] : memref<64x8xbf16, #tpu.memory_space<vmem>>, vector<64x8xbf16>
    %cst_20 = arith.constant dense<0.000000e+00> : vector<64x8xf32>
    %27 = tpu.matmul %25, %26, %cst_20 {dimension_numbers = #tpu.dot_dimension_numbers<[1], [0], [0], [1], [0, 0, 1, 1], [], []>} : vector<64x64xbf16>, vector<64x8xbf16>, vector<64x8xf32> -> vector<64x8xf32>
    %c0_21 = arith.constant 0 : index
    %c0_22 = arith.constant 0 : index
    %28 = vector.load %arg9[%c0_21, %c0_22] : memref<1x8xf32, #tpu.memory_space<vmem>>, vector<1x8xf32>
    %29 = vector.broadcast %28 : vector<1x8xf32> to vector<64x8xf32>
    %30 = arith.addf %27, %29 : vector<64x8xf32>
    %31 = vector.extract_strided_slice %0 {offsets = [0, 8], sizes = [64, 8], strides = [1, 1]} : vector<64x34xf32> to vector<64x8xf32>
    %32 = arith.mulf %30, %31 : vector<64x8xf32>
    %33 = vector.extract_strided_slice %0 {offsets = [0, 0], sizes = [64, 8], strides = [1, 1]} : vector<64x34xf32> to vector<64x8xf32>
    %34 = arith.addf %32, %33 : vector<64x8xf32>
    %c0_23 = arith.constant 0 : index
    %c0_24 = arith.constant 0 : index
    %35 = vector.load %arg10[%c0_23, %c0_24] : memref<64x8xf32, #tpu.memory_space<vmem>>, vector<64x8xf32>
    tpu.vector_store %arg10[%c0_23, %c0_24], %34 {strides = array<i32>} : memref<64x8xf32, #tpu.memory_space<vmem>>, vector<64x8xf32>,
    return
  }
  func.func @transform_0(%arg0: i32) -> (i32, i32) {
    %c0_i32 = arith.constant 0 : i32
    %c0_i32_0 = arith.constant 0 : i32
    return %arg0, %c0_i32 : i32, i32
  }
  func.func @transform_1(%arg0: i32) -> (i32, i32) {
    %c0_i32 = arith.constant 0 : i32
    %c0_i32_0 = arith.constant 0 : i32
    %c0_i32_1 = arith.constant 0 : i32
    return %c0_i32, %c0_i32_0 : i32, i32
  }
  func.func @transform_2(%arg0: i32) -> (i32, i32) {
    %c0_i32 = arith.constant 0 : i32
    %c0_i32_0 = arith.constant 0 : i32
    %c0_i32_1 = arith.constant 0 : i32
    return %c0_i32, %c0_i32_0 : i32, i32
  }
  func.func @transform_3(%arg0: i32) -> (i32, i32) {
    %c0_i32 = arith.constant 0 : i32
    %c0_i32_0 = arith.constant 0 : i32
    %c0_i32_1 = arith.constant 0 : i32
    return %c0_i32, %c0_i32_0 : i32, i32
  }
  func.func @transform_4(%arg0: i32) -> (i32, i32) {
    %c0_i32 = arith.constant 0 : i32
    %c0_i32_0 = arith.constant 0 : i32
    %c0_i32_1 = arith.constant 0 : i32
    return %c0_i32, %c0_i32_0 : i32, i32
  }
  func.func @transform_5(%arg0: i32) -> (i32, i32) {
    %c0_i32 = arith.constant 0 : i32
    %c0_i32_0 = arith.constant 0 : i32
    %c0_i32_1 = arith.constant 0 : i32
    return %c0_i32, %c0_i32_0 : i32, i32
  }
  func.func @transform_6(%arg0: i32) -> (i32, i32) {
    %c0_i32 = arith.constant 0 : i32
    %c0_i32_0 = arith.constant 0 : i32
    %c0_i32_1 = arith.constant 0 : i32
    return %c0_i32, %c0_i32_0 : i32, i32
  }
  func.func @transform_7(%arg0: i32) -> (i32, i32) {
    %c0_i32 = arith.constant 0 : i32
    %c0_i32_0 = arith.constant 0 : i32
    %c0_i32_1 = arith.constant 0 : i32
    return %c0_i32, %c0_i32_0 : i32, i32
  }
  func.func @transform_8(%arg0: i32) -> (i32, i32) {
    %c0_i32 = arith.constant 0 : i32
    %c0_i32_0 = arith.constant 0 : i32
    %c0_i32_1 = arith.constant 0 : i32
    return %c0_i32, %c0_i32_0 : i32, i32
  }
  func.func @transform_9(%arg0: i32) -> (i32, i32) {
    %c0_i32 = arith.constant 0 : i32
    %c0_i32_0 = arith.constant 0 : i32
    return %arg0, %c0_i32 : i32, i32
  }
}

</mosaic_0001>

<llo_original>
// kernel: tpu_custom_call.1
$region0: #{tpu_custom_call.1}
  #allocation0 [shape = 'u32[]', space=smem, size = 0x4, offset = 0x4, fixed_abs, tag = 'smem constant byte address 0x4 - core index']
  #allocation1 [shape = 'u32[72,128]{1,0:T(1,128)}', space=vmem, size = 0x9000, scoped, tag = 'internal scratch']
  %s0 = inlined_call_operand.vmem [shape: f32[64,34], index: 0, kind: input, shape index: {}]
  %s1 = inlined_call_operand.vmem [shape: bf16[34,32], index: 1, kind: input, shape index: {}]
  %s2 = inlined_call_operand.vmem [shape: f32[1,32], index: 2, kind: input, shape index: {}]
  %s3 = inlined_call_operand.vmem [shape: bf16[32,128], index: 3, kind: input, shape index: {}]
  %s4 = inlined_call_operand.vmem [shape: f32[1,128], index: 4, kind: input, shape index: {}]
  %s5 = inlined_call_operand.vmem [shape: bf16[128,64], index: 5, kind: input, shape index: {}]
  %s6 = inlined_call_operand.vmem [shape: f32[1,64], index: 6, kind: input, shape index: {}]
  %s7 = inlined_call_operand.vmem [shape: bf16[64,8], index: 7, kind: input, shape index: {}]
  %s8 = inlined_call_operand.vmem [shape: f32[1,8], index: 8, kind: input, shape index: {}]
  %s9 = inlined_call_operand.vmem [shape: f32[64,8], index: 9, kind: output, shape index: {}]
  %s10 = sld [smem:[#allocation0]]
  $region46: #{tpu_custom_call.1} parent=0
    _
  %s12 = ssub.s32 1, %s10
  %s13 = scalar_select 0, %s12, %s10
  // Predicated region
  $region2: #{tpu_custom_call.1} parent=0 // pred_check
    _
  $region3: #{tpu_custom_call.1} parent=0 // pred_check_branch
    %15 = sbr.rel (0) target = $region5
  $region4: #{tpu_custom_call.1} parent=0 // pred_region
    _
  $region5: #{tpu_custom_call.1} parent=0 // pred_fallthru
    _
  // Predicated region
  $region6: #{tpu_custom_call.1} parent=0 // pred_check
    _
  $region7: #{tpu_custom_call.1} parent=0 // pred_check_branch
    %17 = sbr.rel (0) target = $region9
  $region8: #{tpu_custom_call.1} parent=0 // pred_region
    _
  $region9: #{tpu_custom_call.1} parent=0 // pred_fallthru
    _
  // Predicated region
  $region10: #{tpu_custom_call.1} parent=0 // pred_check
    _
  $region11: #{tpu_custom_call.1} parent=0 // pred_check_branch
    %19 = sbr.rel (0) target = $region13
  $region12: #{tpu_custom_call.1} parent=0 // pred_region
    _
  $region13: #{tpu_custom_call.1} parent=0 // pred_fallthru
    _
  // Predicated region
  $region14: #{tpu_custom_call.1} parent=0 // pred_check
    _
  $region15: #{tpu_custom_call.1} parent=0 // pred_check_branch
    %21 = sbr.rel (0) target = $region17
  $region16: #{tpu_custom_call.1} parent=0 // pred_region
    _
  $region17: #{tpu_custom_call.1} parent=0 // pred_fallthru
    _
  // Predicated region
  $region18: #{tpu_custom_call.1} parent=0 // pred_check
    _
  $region19: #{tpu_custom_call.1} parent=0 // pred_check_branch
    %23 = sbr.rel (0) target = $region21
  $region20: #{tpu_custom_call.1} parent=0 // pred_region
    _
  $region21: #{tpu_custom_call.1} parent=0 // pred_fallthru
    _
  // Predicated region
  $region22: #{tpu_custom_call.1} parent=0 // pred_check
    _
  $region23: #{tpu_custom_call.1} parent=0 // pred_check_branch
    %25 = sbr.rel (0) target = $region25
  $region24: #{tpu_custom_call.1} parent=0 // pred_region
    _
  $region25: #{tpu_custom_call.1} parent=0 // pred_fallthru
    _
  // Predicated region
  $region26: #{tpu_custom_call.1} parent=0 // pred_check
    _
  $region27: #{tpu_custom_call.1} parent=0 // pred_check_branch
    %27 = sbr.rel (0) target = $region29
  $region28: #{tpu_custom_call.1} parent=0 // pred_region
    _
  $region29: #{tpu_custom_call.1} parent=0 // pred_fallthru
    _
  // Predicated region
  $region30: #{tpu_custom_call.1} parent=0 // pred_check
    _
  $region31: #{tpu_custom_call.1} parent=0 // pred_check_branch
    %29 = sbr.rel (0) target = $region33
  $region32: #{tpu_custom_call.1} parent=0 // pred_region
    _
  $region33: #{tpu_custom_call.1} parent=0 // pred_fallthru
    _
  // Predicated region
  $region34: #{tpu_custom_call.1} parent=0 // pred_check
    _
  $region35: #{tpu_custom_call.1} parent=0 // pred_check_branch
    %31 = sbr.rel (0) target = $region37
  $region36: #{tpu_custom_call.1} parent=0 // pred_region
    _
  $region37: #{tpu_custom_call.1} parent=0 // pred_fallthru
    _
  %v33 = vld [vmem:[%s0] sm:$0xff]
  %v34 = vld [vmem:[%s0 + $0x8] sm:$0xff]
  %v35 = vld [vmem:[%s0 + $0x10] sm:$0xff]
  %v36 = vld [vmem:[%s0 + $0x18] sm:$0xff]
  %v37 = vld [vmem:[%s0 + $0x20] sm:$0xff]
  %v38 = vld [vmem:[%s0 + $0x28] sm:$0xff]
  %v39 = vld [vmem:[%s0 + $0x30] sm:$0xff]
  %v40 = vld [vmem:[%s0 + $0x38] sm:$0xff]
  %v41 = vpack.c.bf16 %v34, %v33
  %v42 = vpack.c.bf16 %v36, %v35
  %v43 = vpack.c.bf16 %v38, %v37
  %v44 = vpack.c.bf16 %v40, %v39
  %v45 = vld [vmem:[%s1] sm:$0xf]
  %v46 = vld [vmem:[%s1 + $0x4] sm:$0xf]
  %v47 = vld [vmem:[%s1 + $0x8] sm:$0xf]
  %v48 = vld [vmem:[%s1 + $0xc] sm:$0xf]
  %v49 = vld [vmem:[%s1 + $0x10] sm:$0x1]
  %v50 = vld [vmem:[%s2] sm:$0x1]
  %v52 = vperm.slane %v50, 0
  %v59 = vunpack.c.l.b16 %v45
  %v60 = vunpack.c.l.b16 %v46
  %v61 = vunpack.c.l.b16 %v47
  %v62 = vunpack.c.l.b16 %v48
  %v63 = vunpack.c.l.b16 %v49
  %v64 = vpack.c.b16 %v60, %v59
  %v65 = vpack.c.b16 %v62, %v61
  %v66 = vpack.c.b16 %v63, %v63
  %vm69 = vcmask 277504
  %v71 = vsel %vm69, %v41, 0
  %v74 = vsel %vm69, %v42, 0
  %v77 = vsel %vm69, %v43, 0
  %v80 = vsel %vm69, %v44, 0
  %vm82 = vcmask 1040384
  %v84 = vsel %vm82, %v66, 0
  %86 = vmatpush.bf16.msra.mxu0 0
  %87 = vmatpush.bf16.msra.mxu0 0
  %88 = vmatpush.bf16.msra.mxu0 0
  %89 = vmatpush.bf16.msra.mxu0 0
  %90 = vmatpush.bf16.msra.mxu0 0
  %91 = vmatpush.bf16.msra.mxu0 %v84
  %92 = vmatpush.bf16.msra.mxu0 %v65
  %93 = vmatpush.bf16.msra.mxu0 %v64
  %94 = vmatmul.bf16.gmra.mxu0 %v71
  %v95 = vpop.f32.mrf.mxu0
  %v96 = vadd.f32 %v52, %v95
  %v97 = vpop.f32.mrf.mxu0
  %v98 = vadd.f32 %v52, %v97
  %99 = vmatmul.bf16.gmra.mxu0 %v74
  %v100 = vpop.f32.mrf.mxu0
  %v101 = vadd.f32 %v52, %v100
  %v102 = vpop.f32.mrf.mxu0
  %v103 = vadd.f32 %v52, %v102
  %104 = vmatmul.bf16.gmra.mxu0 %v77
  %v105 = vpop.f32.mrf.mxu0
  %v106 = vadd.f32 %v52, %v105
  %v107 = vpop.f32.mrf.mxu0
  %v108 = vadd.f32 %v52, %v107
  %109 = vmatmul.bf16.gmra.mxu0 %v80
  %v110 = vpop.f32.mrf.mxu0
  %v111 = vadd.f32 %v52, %v110
  %v112 = vpop.f32.mrf.mxu0
  %v113 = vadd.f32 %v52, %v112
  %114 = vdwg.mxu0
  %v115 = vmax.f32 %v96, 0.0
  %v116 = vmax.f32 %v98, 0.0
  %v117 = vmax.f32 %v101, 0.0
  %v118 = vmax.f32 %v103, 0.0
  %v119 = vmax.f32 %v106, 0.0
  %v120 = vmax.f32 %v108, 0.0
  %v121 = vmax.f32 %v111, 0.0
  %v122 = vmax.f32 %v113, 0.0
  %v123 = vpack.c.bf16 %v116, %v115
  %v124 = vpack.c.bf16 %v118, %v117
  %v125 = vpack.c.bf16 %v120, %v119
  %v126 = vpack.c.bf16 %v122, %v121
  %v127 = vld [vmem:[%s3] sm:$0xf]
  %v128 = vld [vmem:[%s3 + $0x4] sm:$0xf]
  %v129 = vld [vmem:[%s3 + $0x8] sm:$0xf]
  %v130 = vld [vmem:[%s3 + $0xc] sm:$0xf]
  %v131 = vld [vmem:[%s4] sm:$0x1]
  %v133 = vperm.slane %v131, 0
  %v139 = vunpack.c.l.b16 %v127
  %v140 = vunpack.c.l.b16 %v128
  %v141 = vunpack.c.l.b16 %v129
  %v142 = vunpack.c.l.b16 %v130
  %v143 = vpack.c.b16 %v140, %v139
  %v144 = vpack.c.b16 %v142, %v141
  %vm147 = vcmask 261120
  %v149 = vsel %vm147, %v123, 0
  %v152 = vsel %vm147, %v124, 0
  %v155 = vsel %vm147, %v125, 0
  %v158 = vsel %vm147, %v126, 0
  %160 = vmatpush.bf16.msra.mxu0 0
  %161 = vmatpush.bf16.msra.mxu0 0
  %162 = vmatpush.bf16.msra.mxu0 0
  %163 = vmatpush.bf16.msra.mxu0 0
  %164 = vmatpush.bf16.msra.mxu0 0
  %165 = vmatpush.bf16.msra.mxu0 0
  %166 = vmatpush.bf16.msra.mxu0 %v144
  %167 = vmatpush.bf16.msra.mxu0 %v143
  %168 = vmatmul.bf16.gmra.mxu0 %v149
  %v169 = vpop.f32.mrf.mxu0
  %v170 = vadd.f32 %v133, %v169
  %v171 = vpop.f32.mrf.mxu0
  %v172 = vadd.f32 %v133, %v171
  %173 = vmatmul.bf16.gmra.mxu0 %v152
  %v174 = vpop.f32.mrf.mxu0
  %v175 = vadd.f32 %v133, %v174
  %v176 = vpop.f32.mrf.mxu0
  %v177 = vadd.f32 %v133, %v176
  %178 = vmatmul.bf16.gmra.mxu0 %v155
  %v179 = vpop.f32.mrf.mxu0
  %v180 = vadd.f32 %v133, %v179
  %v181 = vpop.f32.mrf.mxu0
  %v182 = vadd.f32 %v133, %v181
  %183 = vmatmul.bf16.gmra.mxu0 %v158
  %v184 = vpop.f32.mrf.mxu0
  %v185 = vadd.f32 %v133, %v184
  %v186 = vpop.f32.mrf.mxu0
  %v187 = vadd.f32 %v133, %v186
  %188 = vdwg.mxu0
  %v189 = vmax.f32 %v170, 0.0
  %v190 = vmax.f32 %v172, 0.0
  %v191 = vmax.f32 %v175, 0.0
  %v192 = vmax.f32 %v177, 0.0
  %v193 = vmax.f32 %v180, 0.0
  %v194 = vmax.f32 %v182, 0.0
  %v195 = vmax.f32 %v185, 0.0
  %v196 = vmax.f32 %v187, 0.0
  %v197 = vpack.c.bf16 %v190, %v189
  %v198 = vpack.c.bf16 %v192, %v191
  %v199 = vpack.c.bf16 %v194, %v193
  %v200 = vpack.c.bf16 %v196, %v195
  %v201 = vld [vmem:[%s5] sm:$0xf]
  %v202 = vld [vmem:[%s5 + $0x4] sm:$0xf]
  %v203 = vld [vmem:[%s5 + $0x8] sm:$0xf]
  %v204 = vld [vmem:[%s5 + $0xc] sm:$0xf]
  %v205 = vld [vmem:[%s5 + $0x10] sm:$0xf]
  %v206 = vld [vmem:[%s5 + $0x14] sm:$0xf]
  %v207 = vld [vmem:[%s5 + $0x18] sm:$0xf]
  %v208 = vld [vmem:[%s5 + $0x1c] sm:$0xf]
  %v209 = vld [vmem:[%s5 + $0x20] sm:$0xf]
  %v210 = vld [vmem:[%s5 + $0x24] sm:$0xf]
  %v211 = vld [vmem:[%s5 + $0x28] sm:$0xf]
  %v212 = vld [vmem:[%s5 + $0x2c] sm:$0xf]
  %v213 = vld [vmem:[%s5 + $0x30] sm:$0xf]
  %v214 = vld [vmem:[%s5 + $0x34] sm:$0xf]
  %v215 = vld [vmem:[%s5 + $0x38] sm:$0xf]
  %v216 = vld [vmem:[%s5 + $0x3c] sm:$0xf]
  %v217 = vld [vmem:[%s6] sm:$0x1]
  %v219 = vperm.slane %v217, 0
  %v237 = vunpack.c.l.b16 %v201
  %v238 = vunpack.c.l.b16 %v202
  %v239 = vunpack.c.l.b16 %v203
  %v240 = vunpack.c.l.b16 %v204
  %v241 = vunpack.c.l.b16 %v205
  %v242 = vunpack.c.l.b16 %v206
  %v243 = vunpack.c.l.b16 %v207
  %v244 = vunpack.c.l.b16 %v208
  %v245 = vunpack.c.l.b16 %v209
  %v246 = vunpack.c.l.b16 %v210
  %v247 = vunpack.c.l.b16 %v211
  %v248 = vunpack.c.l.b16 %v212
  %v249 = vunpack.c.l.b16 %v213
  %v250 = vunpack.c.l.b16 %v214
  %v251 = vunpack.c.l.b16 %v215
  %v252 = vunpack.c.l.b16 %v216
  %v253 = vpack.c.b16 %v238, %v237
  %v254 = vpack.c.b16 %v240, %v239
  %v255 = vpack.c.b16 %v242, %v241
  %v256 = vpack.c.b16 %v244, %v243
  %v257 = vpack.c.b16 %v246, %v245
  %v258 = vpack.c.b16 %v248, %v247
  %v259 = vpack.c.b16 %v250, %v249
  %v260 = vpack.c.b16 %v252, %v251
  %269 = vmatpush.bf16.msra.mxu0 %v260
  %270 = vmatpush.bf16.msra.mxu0 %v259
  %271 = vmatpush.bf16.msra.mxu0 %v258
  %272 = vmatpush.bf16.msra.mxu0 %v257
  %273 = vmatpush.bf16.msra.mxu0 %v256
  %274 = vmatpush.bf16.msra.mxu0 %v255
  %275 = vmatpush.bf16.msra.mxu0 %v254
  %276 = vmatpush.bf16.msra.mxu0 %v253
  %277 = vmatmul.bf16.gmra.mxu0 %v197
  %v278 = vpop.f32.mrf.mxu0
  %v279 = vadd.f32 %v219, %v278
  %v280 = vpop.f32.mrf.mxu0
  %v281 = vadd.f32 %v219, %v280
  %282 = vmatmul.bf16.gmra.mxu0 %v198
  %v283 = vpop.f32.mrf.mxu0
  %v284 = vadd.f32 %v219, %v283
  %v285 = vpop.f32.mrf.mxu0
  %v286 = vadd.f32 %v219, %v285
  %287 = vmatmul.bf16.gmra.mxu0 %v199
  %v288 = vpop.f32.mrf.mxu0
  %v289 = vadd.f32 %v219, %v288
  %v290 = vpop.f32.mrf.mxu0
  %v291 = vadd.f32 %v219, %v290
  %292 = vmatmul.bf16.gmra.mxu0 %v200
  %v293 = vpop.f32.mrf.mxu0
  %v294 = vadd.f32 %v219, %v293
  %v295 = vpop.f32.mrf.mxu0
  %v296 = vadd.f32 %v219, %v295
  %297 = vdwg.mxu0
  %v298 = vmax.f32 %v279, 0.0
  %v299 = vmax.f32 %v281, 0.0
  %v300 = vmax.f32 %v284, 0.0
  %v301 = vmax.f32 %v286, 0.0
  %v302 = vmax.f32 %v289, 0.0
  %v303 = vmax.f32 %v291, 0.0
  %v304 = vmax.f32 %v294, 0.0
  %v305 = vmax.f32 %v296, 0.0
  %v306 = vpack.c.bf16 %v299, %v298
  %v307 = vpack.c.bf16 %v301, %v300
  %v308 = vpack.c.bf16 %v303, %v302
  %v309 = vpack.c.bf16 %v305, %v304
  %v310 = vld [vmem:[%s7] sm:$0xf]
  %v311 = vld [vmem:[%s7 + $0x4] sm:$0xf]
  %v312 = vld [vmem:[%s7 + $0x8] sm:$0xf]
  %v313 = vld [vmem:[%s7 + $0xc] sm:$0xf]
  %v314 = vld [vmem:[%s7 + $0x10] sm:$0xf]
  %v315 = vld [vmem:[%s7 + $0x14] sm:$0xf]
  %v316 = vld [vmem:[%s7 + $0x18] sm:$0xf]
  %v317 = vld [vmem:[%s7 + $0x1c] sm:$0xf]
  %v318 = vld [vmem:[%s8] sm:$0x1]
  %v320 = vperm.slane %v318, 0
  %v330 = vunpack.c.l.b16 %v310
  %v331 = vunpack.c.l.b16 %v311
  %v332 = vunpack.c.l.b16 %v312
  %v333 = vunpack.c.l.b16 %v313
  %v334 = vunpack.c.l.b16 %v314
  %v335 = vunpack.c.l.b16 %v315
  %v336 = vunpack.c.l.b16 %v316
  %v337 = vunpack.c.l.b16 %v317
  %v338 = vpack.c.b16 %v331, %v330
  %v339 = vpack.c.b16 %v333, %v332
  %v340 = vpack.c.b16 %v335, %v334
  %v341 = vpack.c.b16 %v337, %v336
  %vm346 = vcmask 523264
  %v348 = vsel %vm346, %v306, 0
  %v351 = vsel %vm346, %v307, 0
  %v354 = vsel %vm346, %v308, 0
  %v357 = vsel %vm346, %v309, 0
  %359 = vmatpush.bf16.msra.mxu0 0
  %360 = vmatpush.bf16.msra.mxu0 0
  %361 = vmatpush.bf16.msra.mxu0 0
  %362 = vmatpush.bf16.msra.mxu0 0
  %363 = vmatpush.bf16.msra.mxu0 %v341
  %364 = vmatpush.bf16.msra.mxu0 %v340
  %365 = vmatpush.bf16.msra.mxu0 %v339
  %366 = vmatpush.bf16.msra.mxu0 %v338
  %367 = vmatmul.bf16.gmra.mxu0 %v348
  %v368 = vpop.f32.mrf.mxu0
  %v369 = vadd.f32 %v320, %v368
  %v370 = vpop.f32.mrf.mxu0
  %v371 = vadd.f32 %v320, %v370
  %372 = vmatmul.bf16.gmra.mxu0 %v351
  %v373 = vpop.f32.mrf.mxu0
  %v374 = vadd.f32 %v320, %v373
  %v375 = vpop.f32.mrf.mxu0
  %v376 = vadd.f32 %v320, %v375
  %377 = vmatmul.bf16.gmra.mxu0 %v354
  %v378 = vpop.f32.mrf.mxu0
  %v379 = vadd.f32 %v320, %v378
  %v380 = vpop.f32.mrf.mxu0
  %v381 = vadd.f32 %v320, %v380
  %382 = vmatmul.bf16.gmra.mxu0 %v357
  %v383 = vpop.f32.mrf.mxu0
  %v384 = vadd.f32 %v320, %v383
  %v385 = vpop.f32.mrf.mxu0
  %v386 = vadd.f32 %v320, %v385
  %387 = vdwg.mxu0
  %396 = vrot.lane.b32.xlu0 %v33, 120
  %v397 = vpop.permute.xlu0 %396
  %398 = vrot.lane.b32.xlu0 %v34, 120
  %v399 = vpop.permute.xlu0 %398
  %400 = vrot.lane.b32.xlu0 %v35, 120
  %v401 = vpop.permute.xlu0 %400
  %402 = vrot.lane.b32.xlu0 %v36, 120
  %v403 = vpop.permute.xlu0 %402
  %404 = vrot.lane.b32.xlu0 %v37, 120
  %v405 = vpop.permute.xlu0 %404
  %406 = vrot.lane.b32.xlu0 %v38, 120
  %v407 = vpop.permute.xlu0 %406
  %408 = vrot.lane.b32.xlu0 %v39, 120
  %v409 = vpop.permute.xlu0 %408
  %410 = vrot.lane.b32.xlu0 %v40, 120
  %v411 = vpop.permute.xlu0 %410
  %v420 = vmul.f32 %v369, %v397
  %v421 = vmul.f32 %v371, %v399
  %v422 = vmul.f32 %v374, %v401
  %v423 = vmul.f32 %v376, %v403
  %v424 = vmul.f32 %v379, %v405
  %v425 = vmul.f32 %v381, %v407
  %v426 = vmul.f32 %v384, %v409
  %v427 = vmul.f32 %v386, %v411
  %v428 = vadd.f32 %v420, %v33
  %v429 = vadd.f32 %v421, %v34
  %v430 = vadd.f32 %v422, %v35
  %v431 = vadd.f32 %v423, %v36
  %v432 = vadd.f32 %v424, %v37
  %v433 = vadd.f32 %v425, %v38
  %v434 = vadd.f32 %v426, %v39
  %v435 = vadd.f32 %v427, %v40
  %vm436 = vcmask 64512
  %437 = vst.msk [vmem:[%s9] sm:$0xff] %vm436, %v428
  %438 = vst.msk [vmem:[%s9 + $0x8] sm:$0xff] %vm436, %v429
  %439 = vst.msk [vmem:[%s9 + $0x10] sm:$0xff] %vm436, %v430
  %440 = vst.msk [vmem:[%s9 + $0x18] sm:$0xff] %vm436, %v431
  %441 = vst.msk [vmem:[%s9 + $0x20] sm:$0xff] %vm436, %v432
  %442 = vst.msk [vmem:[%s9 + $0x28] sm:$0xff] %vm436, %v433
  %443 = vst.msk [vmem:[%s9 + $0x30] sm:$0xff] %vm436, %v434
  %444 = vst.msk [vmem:[%s9 + $0x38] sm:$0xff] %vm436, %v435
  // Predicated region
  $region38: #{tpu_custom_call.1} parent=0 // pred_check
    _
  $region39: #{tpu_custom_call.1} parent=0 // pred_check_branch
    %446 = sbr.rel (0) target = $region41
  $region40: #{tpu_custom_call.1} parent=0 // pred_region
    _
  $region41: #{tpu_custom_call.1} parent=0 // pred_fallthru
    _
  // Predicated region
  $region42: #{tpu_custom_call.1} parent=0 // pred_check
    _
  $region43: #{tpu_custom_call.1} parent=0 // pred_check_branch
    %448 = sbr.rel (0) target = $region45
  $region44: #{tpu_custom_call.1} parent=0 // pred_region
    _
  $region45: #{tpu_custom_call.1} parent=0 // pred_fallthru
    _

</llo_original>
